<compile_context>
chip_gen: v7x
topology: tpu7x:2x2x1
jax: 0.10.0
libtpu: 0.0.40
codegen_flags: <defaults>
</compile_context>

<pallas_src>
import functools

import jax
import jax.numpy as jnp
from jax.experimental import pallas as pl
from jax.experimental.pallas import tpu as pltpu


def _distil_ce_kernel(s_ref, t_ref, o_ref, *, temperature, total_rows,
                      needs_mask):
    """One (tb, V) tile -> (tb, 1) per-row losses.

    row_loss = Σ_v p_t,v · (logZ_s - s_shift_v)
             = logZ_s - (Σ_v e_t,v · s_shift_v) / Z_t
    """
    i = pl.program_id(0)
    tb = s_ref.shape[0]

    inv_t = jnp.float32(1.0 / temperature)
    s = s_ref[...].astype(jnp.float32) * inv_t
    t = t_ref[...].astype(jnp.float32) * inv_t

    # Numerically stable softmax pieces over the last (lane) axis.
    s_shift = s - jnp.max(s, axis=-1, keepdims=True)          # (tb, V)
    t_shift = t - jnp.max(t, axis=-1, keepdims=True)          # (tb, V)

    e_s = jnp.exp(s_shift)                                     # exp #1, dies after sum
    log_z_s = jnp.log(jnp.sum(e_s, axis=-1, keepdims=True))    # (tb, 1)

    e_t = jnp.exp(t_shift)                                     # exp #2
    z_t = jnp.sum(e_t, axis=-1, keepdims=True)                 # (tb, 1)
    cross = jnp.sum(e_t * s_shift, axis=-1, keepdims=True)     # (tb, 1)

    row_loss = log_z_s - cross / z_t                           # (tb, 1)

    if needs_mask:
        # Only rows past the true row count need zeroing (remainder tile and
        # the R<8 zero-pad path); this is O(tb) work, not O(tb*V).
        row_ids = i * tb + jax.lax.broadcasted_iota(jnp.int32, (tb, 1), 0)
        row_loss = jnp.where(row_ids < total_rows, row_loss, 0.0)

    o_ref[...] = row_loss


def _pick_tb(r_padded, v, in_itemsize, vmem_limit_bytes, big_vmem):
    """Row-tile size.

    Budget = 2 inputs x 2 pipeline buffers (wire dtype) + ~3 live f32 (tb, V)
    temporaries (s_shift, e_s/e_t, cross product), kept well under the VMEM
    limit.  Bigger target blocks on 128-MiB-VMEM chips; >= 2 grid steps so the
    'parallel' axis can be sharded across v7x's 2 TensorCores.
    """
    target_block_bytes = (8 << 20) if big_vmem else (2 << 20)
    tb_target = target_block_bytes // max(1, v * in_itemsize)

    row_bytes = 2 * 2 * v * in_itemsize + 3 * v * 4
    tb_cap = int(vmem_limit_bytes * 0.6) // max(1, row_bytes)

    tb = min(tb_target, tb_cap, 4096)

    if r_padded >= 16:
        # Keep at least 2 grid steps.
        tb = min(tb, max(8, ((r_padded // 2) // 8) * 8))
    tb = min(tb, max(8, (r_padded // 8) * 8))
    return int(max(8, (tb // 8) * 8))


def distil_ce_loss(s_logits, t_logits, temperature=2.0, *, tb=None,
                   vmem_limit_bytes=None):
    """Pallas implementation of DistilCELoss.forward. Returns a float32 scalar."""
    assert s_logits.shape == t_logits.shape
    V = s_logits.shape[-1]
    # Keep the original dtype on the wire (bf16 halves HBM traffic); the f32
    # upcast happens inside the kernel.
    s2 = s_logits.reshape(-1, V)
    t2 = t_logits.reshape(-1, V)
    R = s2.shape[0]

    # Tiny inputs: pad rows up to the minimum 8-sublane tile (masked in-kernel).
    if R < 8:
        pad = 8 - R
        s2 = jnp.pad(s2, ((0, pad), (0, 0)))
        t2 = jnp.pad(t2, ((0, pad), (0, 0)))
    r_padded = s2.shape[0]

    if vmem_limit_bytes is None:
        try:
            phys = int(pltpu.get_tpu_info().vmem_capacity_bytes)
        except Exception:
            phys = 64 * 1024 * 1024  # conservative (v7x per-TC VMEM)
        vmem_limit_bytes = min(int(phys * 3 // 4), 96 * 1024 * 1024)
    big_vmem = vmem_limit_bytes >= (72 * 1024 * 1024)  # v5e / v6e class

    itemsize = max(s2.dtype.itemsize, t2.dtype.itemsize)
    if tb is None:
        tb = _pick_tb(r_padded, V, itemsize, vmem_limit_bytes, big_vmem)
    else:
        tb = max(8, min((int(tb) // 8) * 8, max(8, (r_padded // 8) * 8)))

    grid = pl.cdiv(r_padded, tb)
    out_rows = grid * tb
    needs_mask = bool(out_rows != R)   # padded rows exist -> must be zeroed

    cost = pl.CostEstimate(
        flops=int(10 * r_padded * V),
        transcendentals=int(2 * r_padded * V),
        bytes_accessed=int(s2.size * s2.dtype.itemsize
                           + t2.size * t2.dtype.itemsize
                           + out_rows * 4),
    )

    row_losses = pl.pallas_call(
        functools.partial(_distil_ce_kernel,
                          temperature=float(temperature),
                          total_rows=int(R),
                          needs_mask=needs_mask),
        out_shape=jax.ShapeDtypeStruct((out_rows, 1), jnp.float32),
        grid_spec=pltpu.PrefetchScalarGridSpec(
            num_scalar_prefetch=0,
            grid=(grid,),
            in_specs=[
                pl.BlockSpec((tb, V), lambda i: (i, 0)),
                pl.BlockSpec((tb, V), lambda i: (i, 0)),
            ],
            out_specs=pl.BlockSpec((tb, 1), lambda i: (i, 0)),
        ),
        compiler_params=pltpu.CompilerParams(
            dimension_semantics=("parallel",),  # no carried state -> 2-TC shardable
            vmem_limit_bytes=int(vmem_limit_bytes),
        ),
        cost_estimate=cost,
    )(s2, t2)

    scale = jnp.float32(float(temperature) * float(temperature) / R)
    return jnp.sum(row_losses, dtype=jnp.float32) * scale


def distil_ce_loss_ref(s_logits, t_logits, temperature=2.0):
    """Pure-JAX reference mirroring the PyTorch DistilCELoss module."""
    log_ps = jax.nn.log_softmax(s_logits.astype(jnp.float32) / temperature, axis=-1)
    pt = jax.nn.softmax(t_logits.astype(jnp.float32) / temperature, axis=-1)
    loss = -jnp.sum(pt * log_ps, axis=-1, dtype=jnp.float32).mean()
    return loss * temperature ** 2


if __name__ == "__main__":
    key = jax.random.PRNGKey(0)
    k1, k2, k3, k4 = jax.random.split(key, 4)

    # batch=2, seq=8, vocab=128  -> 16 rows of width 128.
    s_logits = jax.random.normal(k1, (2, 8, 128), dtype=jnp.float32)
    t_logits = jax.random.normal(k2, (2, 8, 128), dtype=jnp.float32)
    loss = distil_ce_loss(s_logits, t_logits, temperature=2.0)
    jax.block_until_ready(loss)
    ref = distil_ce_loss_ref(s_logits, t_logits, temperature=2.0)
    assert jnp.allclose(loss, ref, rtol=1e-5, atol=1e-5), (loss, ref)

    # Row count not divisible by the tile (R = 21) exercises the remainder mask.
    s_logits2 = jax.random.normal(k3, (3, 7, 128), dtype=jnp.float32)
    t_logits2 = jax.random.normal(k4, (3, 7, 128), dtype=jnp.float32)
    loss2 = distil_ce_loss(s_logits2, t_logits2, temperature=3.0)
    jax.block_until_ready(loss2)
    ref2 = distil_ce_loss_ref(s_logits2, t_logits2, temperature=3.0)
    assert jnp.allclose(loss2, ref2, rtol=1e-5, atol=1e-5), (loss2, ref2)

    # Tiny-R path (R < 8) exercises the zero-pad + mask path.
    s_logits3 = jax.random.normal(k1, (1, 3, 128), dtype=jnp.bfloat16)
    t_logits3 = jax.random.normal(k2, (1, 3, 128), dtype=jnp.bfloat16)
    loss3 = distil_ce_loss(s_logits3, t_logits3, temperature=2.0)
    jax.block_until_ready(loss3)
    ref3 = distil_ce_loss_ref(s_logits3, t_logits3, temperature=2.0)
    assert jnp.allclose(loss3, ref3, rtol=2e-2, atol=2e-2), (loss3, ref3)

    print("KERNEL_OK")
</pallas_src>

<mosaic_0001>
module attributes {stable_mosaic.version = 11 : i64} {
  func.func @_distil_ce_kernel(%arg0: i32, %arg1: memref<8x128xf32, #tpu.memory_space<vmem>>, %arg2: memref<8x128xf32, #tpu.memory_space<vmem>>, %arg3: memref<8x1xf32, #tpu.memory_space<vmem>>) attributes {dimension_semantics = [#tpu.dimension_semantics<parallel>], iteration_bounds = array<i64: 2>, scalar_prefetch = 0 : i64, scratch_operands = 0 : i64, tpu.core_type = #tpu.core_type<tc>, window_params = [{transform_indices = @transform_0, window_bounds = array<i64: 8, 128>}, {transform_indices = @transform_1, window_bounds = array<i64: 8, 128>}, {transform_indices = @transform_2, window_bounds = array<i64: 8, 1>}]} {
    %c0 = arith.constant 0 : index
    %c0_0 = arith.constant 0 : index
    %0 = vector.load %arg1[%c0, %c0_0] : memref<8x128xf32, #tpu.memory_space<vmem>>, vector<8x128xf32>
    %cst = arith.constant 5.000000e-01 : f32
    %1 = vector.broadcast %cst : f32 to vector<8x128xf32>
    %2 = arith.mulf %0, %1 : vector<8x128xf32>
    %c0_1 = arith.constant 0 : index
    %c0_2 = arith.constant 0 : index
    %3 = vector.load %arg2[%c0_1, %c0_2] : memref<8x128xf32, #tpu.memory_space<vmem>>, vector<8x128xf32>
    %cst_3 = arith.constant 5.000000e-01 : f32
    %4 = vector.broadcast %cst_3 : f32 to vector<8x128xf32>
    %5 = arith.mulf %3, %4 : vector<8x128xf32>
    %cst_4 = arith.constant dense<0xFF800000> : vector<8xf32>
    %6 = vector.multi_reduction <maximumf>, %2, %cst_4 [1] : vector<8x128xf32> to vector<8xf32>
    %7 = vector.shape_cast %6 : vector<8xf32> to vector<8x1xf32>
    %8 = vector.broadcast %7 : vector<8x1xf32> to vector<8x128xf32>
    %9 = arith.subf %2, %8 : vector<8x128xf32>
    %cst_5 = arith.constant dense<0xFF800000> : vector<8xf32>
    %10 = vector.multi_reduction <maximumf>, %5, %cst_5 [1] : vector<8x128xf32> to vector<8xf32>
    %11 = vector.shape_cast %10 : vector<8xf32> to vector<8x1xf32>
    %12 = vector.broadcast %11 : vector<8x1xf32> to vector<8x128xf32>
    %13 = arith.subf %5, %12 : vector<8x128xf32>
    %14 = math.exp %9 : vector<8x128xf32>
    %cst_6 = arith.constant dense<0.000000e+00> : vector<8xf32>
    %15 = vector.multi_reduction <add>, %14, %cst_6 [1] : vector<8x128xf32> to vector<8xf32>
    %16 = vector.shape_cast %15 : vector<8xf32> to vector<8x1xf32>
    %17 = math.log %16 : vector<8x1xf32>
    %18 = math.exp %13 : vector<8x128xf32>
    %cst_7 = arith.constant dense<0.000000e+00> : vector<8xf32>
    %19 = vector.multi_reduction <add>, %18, %cst_7 [1] : vector<8x128xf32> to vector<8xf32>
    %20 = vector.shape_cast %19 : vector<8xf32> to vector<8x1xf32>
    %21 = arith.mulf %18, %9 : vector<8x128xf32>
    %cst_8 = arith.constant dense<0.000000e+00> : vector<8xf32>
    %22 = vector.multi_reduction <add>, %21, %cst_8 [1] : vector<8x128xf32> to vector<8xf32>
    %23 = vector.shape_cast %22 : vector<8xf32> to vector<8x1xf32>
    %24 = arith.divf %23, %20 : vector<8x1xf32>
    %25 = arith.subf %17, %24 : vector<8x1xf32>
    %c0_9 = arith.constant 0 : index
    %c0_10 = arith.constant 0 : index
    %26 = vector.load %arg3[%c0_9, %c0_10] : memref<8x1xf32, #tpu.memory_space<vmem>>, vector<8x1xf32>
    tpu.vector_store %arg3[%c0_9, %c0_10], %25 {strides = array<i32>} : memref<8x1xf32, #tpu.memory_space<vmem>>, vector<8x1xf32>,
    return
  }
  func.func @transform_0(%arg0: i32) -> (i32, i32) {
    %c0_i32 = arith.constant 0 : i32
    %c0_i32_0 = arith.constant 0 : i32
    return %arg0, %c0_i32 : i32, i32
  }
  func.func @transform_1(%arg0: i32) -> (i32, i32) {
    %c0_i32 = arith.constant 0 : i32
    %c0_i32_0 = arith.constant 0 : i32
    return %arg0, %c0_i32 : i32, i32
  }
  func.func @transform_2(%arg0: i32) -> (i32, i32) {
    %c0_i32 = arith.constant 0 : i32
    %c0_i32_0 = arith.constant 0 : i32
    return %arg0, %c0_i32 : i32, i32
  }
}

</mosaic_0001>

<llo_original>
// kernel: tpu_custom_call.1
$region0: #{tpu_custom_call.1}
  #allocation0 [shape = 'u32[]', space=smem, size = 0x4, offset = 0x4, fixed_abs, tag = 'smem constant byte address 0x4 - core index']
  #allocation1 [shape = 'u32[144,128]{1,0:T(1,128)}', space=vmem, size = 0x12000, scoped, tag = 'internal scratch']
  %s0 = inlined_call_operand.hbm [shape: f32[16,128], index: 0, kind: input, shape index: {}]
  %s1 = inlined_call_operand.hbm [shape: f32[16,128], index: 1, kind: input, shape index: {}]
  %s2 = inlined_call_operand.vmem [shape: f32[16,1], index: 2, kind: output, shape index: {}]
  %s3 = sld [smem:[#allocation0]]
  $region49: #{tpu_custom_call.1} parent=0
    _
  %s5 = ssub.s32 1, %s3
  %s6 = scalar_select 0, %s5, %s3
  $region1: #{tpu_custom_call.1} parent=0
    #allocation2 [shape = 'u8[8192]{0}', space=vmem, size = 0x2000, scoped, tag = 'input window, operand 0']
    #allocation3 [shape = 's32[2]{0}', space=sflag, size = 0x8, scoped, tag = 'scoped memory for tpu_custom_call.1']
    #allocation4 [shape = 'u8[8192]{0}', space=vmem, size = 0x2000, scoped, tag = 'input window, operand 1']
    #allocation5 [shape = 's32[2]{0}', space=sflag, size = 0x8, scoped, tag = 'scoped memory for tpu_custom_call.1']
    %7 = vsyncpa [#allocation3], 0
    %s8 = scalar_lea.sflag [#allocation3], 1
    %9 = vsyncpa %s8, 0
    %10 = vsyncpa [#allocation5], 0
    %s11 = scalar_lea.sflag [#allocation5], 1
    %12 = vsyncpa %s11, 0
    loop: start=0, step=1, limit=4
    $region2: #{tpu_custom_call.1} parent=1 // loop_pre_header
      _
    $region3: #{tpu_custom_call.1} parent=1 // loop_header
      %s14 = sphi 0, %s18
      %p15 = scmp.ge.s32.totalorder %s14, 4
      %s24 = sphi 0, %s26
      %s27 = sphi 0, %s24
      %s28 = sphi 0, %s27
      %s44 = sphi 0, %s28
      %s50 = sphi 0, %s52
      %s53 = sphi 0, %s50
      %s54 = sphi 0, %s53
      %s70 = sphi 0, %s54
      %s76 = sphi 0, %s78
      %s79 = sphi 0, %s76
      %s80 = sphi 0, %s79
      %s96 = sphi 0, %s80
    $region4: #{tpu_custom_call.1} parent=1 // loop_header_branch
      %17 = sbr.rel (%p15) target = $region8
    $region5: #{tpu_custom_call.1} parent=1 // loop_body
      %s19 = ssub.s32 %s14, 1
      %s20 = ssub.s32 %s14, 2
      %s21 = sadd.s32 %s14, 1
      %s22 = ssub.s32 %s14, %s21
      %p23 = scmp.eq.s32.totalorder %s22, 0
      %s25 = sadd.s32 %s24, 1
      %s26 = scalar_select %p23, %s24, %s25
      %p29 = pneg %p23
      %p30 = scmp.eq.s32.totalorder %s14, 1
      %p31 = por %p29, %p30
      %p32 = scmp.ne.s32.totalorder %s24, %s27
      %p33 = scmp.eq.s32.totalorder %s14, 0
      %p34 = por %p32, %p33
      %p35 = scmp.ne.s32.totalorder %s24, %s27
      %p36 = scmp.eq.s32.totalorder %s19, 1
      %p37 = por %p35, %p36
      %p38 = scmp.ne.s32.totalorder %s27, %s28
      %p39 = scmp.eq.s32.totalorder %s19, 0
      %p40 = por %p38, %p39
      %p41 = scmp.ne.s32.totalorder %s27, %s28
      %p42 = scmp.eq.s32.totalorder %s20, 1
      %p43 = por %p41, %p42
      %p45 = scmp.ne.s32.totalorder %s28, %s44
      %p46 = scmp.eq.s32.totalorder %s20, 0
      %p47 = por %p45, %p46
      %s48 = ssub.s32 %s14, %s21
      %p49 = scmp.eq.s32.totalorder %s48, 0
      %s51 = sadd.s32 %s50, 1
      %s52 = scalar_select %p49, %s50, %s51
      %p55 = pneg %p49
      %p56 = scmp.eq.s32.totalorder %s14, 1
      %p57 = por %p55, %p56
      %p58 = scmp.ne.s32.totalorder %s50, %s53
      %p59 = scmp.eq.s32.totalorder %s14, 0
      %p60 = por %p58, %p59
      %p61 = scmp.ne.s32.totalorder %s50, %s53
      %p62 = scmp.eq.s32.totalorder %s19, 1
      %p63 = por %p61, %p62
      %p64 = scmp.ne.s32.totalorder %s53, %s54
      %p65 = scmp.eq.s32.totalorder %s19, 0
      %p66 = por %p64, %p65
      %p67 = scmp.ne.s32.totalorder %s53, %s54
      %p68 = scmp.eq.s32.totalorder %s20, 1
      %p69 = por %p67, %p68
      %p71 = scmp.ne.s32.totalorder %s54, %s70
      %p72 = scmp.eq.s32.totalorder %s20, 0
      %p73 = por %p71, %p72
      %s74 = ssub.s32 %s14, %s21
      %p75 = scmp.eq.s32.totalorder %s74, 0
      %s77 = sadd.s32 %s76, 1
      %s78 = scalar_select %p75, %s76, %s77
      %p81 = pneg %p75
      %p82 = scmp.eq.s32.totalorder %s14, 1
      %p83 = por %p81, %p82
      %p84 = scmp.ne.s32.totalorder %s76, %s79
      %p85 = scmp.eq.s32.totalorder %s14, 0
      %p86 = por %p84, %p85
      %p87 = scmp.ne.s32.totalorder %s76, %s79
      %p88 = scmp.eq.s32.totalorder %s19, 1
      %p89 = por %p87, %p88
      %p90 = scmp.ne.s32.totalorder %s79, %s80
      %p91 = scmp.eq.s32.totalorder %s19, 0
      %p92 = por %p90, %p91
      %p93 = scmp.ne.s32.totalorder %s79, %s80
      %p94 = scmp.eq.s32.totalorder %s20, 1
      %p95 = por %p93, %p94
      %p97 = scmp.ne.s32.totalorder %s80, %s96
      %p98 = scmp.eq.s32.totalorder %s20, 0
      %p99 = por %p97, %p98
      %p100 = scmp.le.s32.totalorder 1, %s14
      %p101 = scmp.lt.s32.totalorder %s14, 3
      %p102 = pnand %p100, %p101
      %p103 = pneg %p102
      // Predicated region
      $region9: #{tpu_custom_call.1} parent=5 // pred_check
        _
      $region10: #{tpu_custom_call.1} parent=5 // pred_check_branch
        %105 = sbr.rel (%p102) target = $region12
      $region11: #{tpu_custom_call.1} parent=5 // pred_region
        %s106 = ssub.s32 %s14, 1
      $region12: #{tpu_custom_call.1} parent=5 // pred_fallthru
        _
      %p107 = scmp.lt.s32.totalorder %s14, 2
      // Predicated region
      $region13: #{tpu_custom_call.1} parent=5 // pred_check
        %p108 = pneg %p107
      $region14: #{tpu_custom_call.1} parent=5 // pred_check_branch
        %110 = sbr.rel (%p108) target = $region16
      $region15: #{tpu_custom_call.1} parent=5 // pred_region
        // Predicated region
        $region17: #{tpu_custom_call.1} parent=15 // pred_check
          %p111 = pneg %p34
        $region18: #{tpu_custom_call.1} parent=15 // pred_check_branch
          %113 = sbr.rel (%p111) target = $region20
        $region19: #{tpu_custom_call.1} parent=15 // pred_region
          %s114 = sand.u32 %s24, 1
          %s115 = scalar_lea.sflag [#allocation3], %s114
          %s116 = sand.u32 %s24, 1
          %s117 = smul.addr %s116, 8
          %s118 = scalar_lea.vmem [#allocation2], %s117
          %s120 = ssub.s32 128, 128
          %121 = vsyncadd %s115, %s120
          %s122 = smul.addr %s14, 128
          %s123 = scalar_lea.hbm %s0, %s122
          %s125 = sshll.u32 %s118, 4
          %s126 = int_to_ptr.vmem [resolvable:$true] %s125
          %128 = dma.hbm_to_vmem [thread:$0]  %s123, 128, %s126, %s115
        $region20: #{tpu_custom_call.1} parent=15 // pred_fallthru
          _
        // Predicated region
        $region21: #{tpu_custom_call.1} parent=15 // pred_check
          %p129 = pneg %p60
        $region22: #{tpu_custom_call.1} parent=15 // pred_check_branch
          %131 = sbr.rel (%p129) target = $region24
        $region23: #{tpu_custom_call.1} parent=15 // pred_region
          %s132 = sand.u32 %s50, 1
          %s133 = scalar_lea.sflag [#allocation5], %s132
          %s134 = sand.u32 %s50, 1
          %s135 = smul.addr %s134, 8
          %s136 = scalar_lea.vmem [#allocation4], %s135
          %s138 = ssub.s32 128, 128
          %139 = vsyncadd %s133, %s138
          %s140 = smul.addr %s14, 128
          %s141 = scalar_lea.hbm %s1, %s140
          %s143 = sshll.u32 %s136, 4
          %s144 = int_to_ptr.vmem [resolvable:$true] %s143
          %146 = dma.hbm_to_vmem [thread:$0]  %s141, 128, %s144, %s133
        $region24: #{tpu_custom_call.1} parent=15 // pred_fallthru
          _
      $region16: #{tpu_custom_call.1} parent=5 // pred_fallthru
        _
      %p147 = scmp.le.s32.totalorder 1, %s14
      %p148 = scmp.lt.s32.totalorder %s14, 3
      %p149 = pnand %p147, %p148
      %p150 = pneg %p149
      // Predicated region
      $region25: #{tpu_custom_call.1} parent=5 // pred_check
        _
      $region26: #{tpu_custom_call.1} parent=5 // pred_check_branch
        %152 = sbr.rel (%p149) target = $region28
      $region27: #{tpu_custom_call.1} parent=5 // pred_region
        %s153 = ssub.s32 %s14, 1
        %s154 = sand.u32 %s27, 1
        %s155 = scalar_lea.sflag [#allocation3], %s154
        %s156 = sand.u32 %s27, 1
        %s157 = smul.addr %s156, 8
        %s158 = scalar_lea.vmem [#allocation2], %s157
        // Predicated region
        $region29: #{tpu_custom_call.1} parent=27 // pred_check
          %p159 = pneg %p40
        $region30: #{tpu_custom_call.1} parent=27 // pred_check_branch
          %161 = sbr.rel (%p159) target = $region32
        $region31: #{tpu_custom_call.1} parent=27 // pred_region
          %162 = dma.done %s155, 128
        $region32: #{tpu_custom_call.1} parent=27 // pred_fallthru
          _
        %s163 = sand.u32 %s53, 1
        %s164 = scalar_lea.sflag [#allocation5], %s163
        %s165 = sand.u32 %s53, 1
        %s166 = smul.addr %s165, 8
        %s167 = scalar_lea.vmem [#allocation4], %s166
        // Predicated region
        $region33: #{tpu_custom_call.1} parent=27 // pred_check
          %p168 = pneg %p66
        $region34: #{tpu_custom_call.1} parent=27 // pred_check_branch
          %170 = sbr.rel (%p168) target = $region36
        $region35: #{tpu_custom_call.1} parent=27 // pred_region
          %171 = dma.done %s164, 128
        $region36: #{tpu_custom_call.1} parent=27 // pred_fallthru
          _
        %s172 = sand.u32 %s27, 1
        %s173 = scalar_lea.sflag [#allocation3], %s172
        %s174 = sand.u32 %s27, 1
        %s175 = smul.addr %s174, 8
        %s176 = scalar_lea.vmem [#allocation2], %s175
        %p177 = pneg %p40
        %p178 = pneg %p37
        %s179 = sand.u32 %s53, 1
        %s180 = scalar_lea.sflag [#allocation5], %s179
        %s181 = sand.u32 %s53, 1
        %s182 = smul.addr %s181, 8
        %s183 = scalar_lea.vmem [#allocation4], %s182
        %p184 = pneg %p66
        %p185 = pneg %p63
        %p186 = pneg %p92
        %p187 = pneg %p89
        %p188 = scmp.lt.s32.totalorder %s19, 1
        %s189 = scalar_select %p188, %s19, 1
        %s190 = smul.addr %s189, 8
        %s191 = scalar_lea.vmem %s2, %s190
        %p192 = scmp.lt.s32.totalorder %s19, 1
        %s193 = scalar_select %p192, %s19, 1
        %s194 = smul.addr %s193, 8
        %s195 = scalar_lea.vmem %s2, %s194
        %v196 = vld [vmem:[%s158] sm:$0xff]
        %v197 = vmul.f32 %v196, 0.5
        %v198 = vld [vmem:[%s167] sm:$0xff]
        %v199 = vmul.f32 %v198, 0.5
        %200 = vmax.xlane.f32.xlu0 %v197
        %v201 = vpop.xlane.xlu0 %200
        %v202 = vsub.f32 %v197, %v201
        %203 = vmax.xlane.f32.xlu0 %v199
        %v204 = vpop.xlane.xlu0 %203
        %v205 = vsub.f32 %v199, %v204
        %v206 = vmul.f32 %v202, 1.442695
        %v207 = vpow.pop %v206
        %208 = vadd.xlane.f32.xlu0 %v207
        %v209 = vpop.xlane.xlu0 %208
        %v210 = vlog2.pop %v209
        %v211 = vmul.f32 %v210, 0.6931472
        %v212 = vmul.f32 %v205, 1.442695
        %v213 = vpow.pop %v212
        %214 = vadd.xlane.f32.xlu0 %v213
        %v215 = vpop.xlane.xlu0 %214
        %v216 = vmul.f32 %v213, %v202
        %217 = vadd.xlane.f32.xlu0 %v216
        %v218 = vpop.xlane.xlu0 %217
        %v219 = vrcp.pop %v215
        %v220 = vmul.f32 %v218, %v219
        %v221 = vsub.f32 %v211, %v220
        %vm222 = vcmask 7168
        %223 = vst.msk [vmem:[%s195] sm:$0xff] %vm222, %v221
        %p224 = scmp.lt.s32.totalorder %s19, 1
        %s225 = scalar_select %p224, %s19, 1
        %s226 = smul.addr %s225, 8
        %s227 = scalar_lea.vmem %s2, %s226
        // Predicated region
        $region37: #{tpu_custom_call.1} parent=27 // pred_check
          %p228 = pneg %p89
        $region38: #{tpu_custom_call.1} parent=27 // pred_check_branch
          %230 = sbr.rel (%p228) target = $region40
        $region39: #{tpu_custom_call.1} parent=27 // pred_region
          _
        $region40: #{tpu_custom_call.1} parent=27 // pred_fallthru
          _
      $region28: #{tpu_custom_call.1} parent=5 // pred_fallthru
        _
      %p231 = scmp.le.s32.totalorder 2, %s14
      // Predicated region
      $region41: #{tpu_custom_call.1} parent=5 // pred_check
        %p232 = pneg %p231
      $region42: #{tpu_custom_call.1} parent=5 // pred_check_branch
        %234 = sbr.rel (%p232) target = $region44
      $region43: #{tpu_custom_call.1} parent=5 // pred_region
        %s235 = ssub.s32 %s14, 2
        // Predicated region
        $region45: #{tpu_custom_call.1} parent=43 // pred_check
          %p236 = pneg %p95
        $region46: #{tpu_custom_call.1} parent=43 // pred_check_branch
          %238 = sbr.rel (%p236) target = $region48
        $region47: #{tpu_custom_call.1} parent=43 // pred_region
          %p239 = scmp.lt.s32.totalorder %s20, 1
          %s240 = scalar_select %p239, %s20, 1
          %s241 = smul.addr %s240, 8
          %s242 = scalar_lea.vmem %s2, %s241
        $region48: #{tpu_custom_call.1} parent=43 // pred_fallthru
          _
      $region44: #{tpu_custom_call.1} parent=5 // pred_fallthru
        _
    $region6: #{tpu_custom_call.1} parent=1 // loop_footer
      %s18 = sadd.s32 1, %s14
    $region7: #{tpu_custom_call.1} parent=1 // loop_footer_branch
      %13 = sbr.rel target = $region3
    $region8: #{tpu_custom_call.1} parent=1 // loop_exit
      _
    %243 = vsyncpa [#allocation3], 1
    %s244 = scalar_lea.sflag [#allocation3], 1
    %245 = vsyncpa %s244, 1
    %246 = vsyncpa [#allocation5], 1
    %s247 = scalar_lea.sflag [#allocation5], 1
    %248 = vsyncpa %s247, 1

</llo_original>
